<compile_context>
chip_gen: v7x
topology: tpu7x:2x2x1
jax: 0.10.0
libtpu: 0.0.40
codegen_flags: <defaults>
</compile_context>

<pallas_src>
import functools

import jax
import jax.numpy as jnp
from jax import lax
from jax.experimental import pallas as pl
from jax.experimental.pallas import tpu as pltpu


# ----------------------------------------------------------------------------- kernels
def _stats_kernel(x_ref, w_ref, stats_ref, sum_acc, sq_acc):
    """Phase 1: accumulate per-output-channel sum(y) and sum(y*y).

    x_ref:     (1, K, T)    bf16 input tile (K = Cin*k*k, T = HW tile)
    w_ref:     (Cout, K)    bf16 weights
    stats_ref: (Cout, 2)    f32 output (col 0 = sum, col 1 = sum of squares)
    sum_acc/sq_acc: (Cout, 1) f32 VMEM scratch, persistent across grid steps
    """
    first = jnp.logical_and(pl.program_id(0) == 0, pl.program_id(1) == 0)
    last = jnp.logical_and(pl.program_id(0) == pl.num_programs(0) - 1,
                           pl.program_id(1) == pl.num_programs(1) - 1)

    @pl.when(first)
    def _():
        sum_acc[...] = jnp.zeros_like(sum_acc)
        sq_acc[...] = jnp.zeros_like(sq_acc)

    # (Cout, K) @ (K, T) -> (Cout, T), f32 accumulation on the MXU.
    y = jnp.dot(w_ref[...], x_ref[0], preferred_element_type=jnp.float32)
    sum_acc[...] += jnp.sum(y, axis=1, keepdims=True)
    sq_acc[...] += jnp.sum(y * y, axis=1, keepdims=True)

    @pl.when(last)
    def _():
        stats_ref[:, 0:1] = sum_acc[...]
        stats_ref[:, 1:2] = sq_acc[...]


def _apply_kernel(x_ref, w_ref, scale_ref, shift_ref, o_ref):
    """Phase 2: recompute y and apply fused BatchNorm affine + ReLU.

    out = relu(y * scale + shift), scale/shift are per-channel (Cout, 1) f32.
    Output block (1, Cout, T): last dim T is lane-dense (multiple of 128 or full HW).
    """
    y = jnp.dot(w_ref[...], x_ref[0], preferred_element_type=jnp.float32)  # (Cout, T)
    out = y * scale_ref[...] + shift_ref[...]
    o_ref[0] = jnp.maximum(out, 0.0).astype(o_ref.dtype)


# ----------------------------------------------------------------------------- helpers
def _pick_hw_tile(hw, cap=2048):
    """Largest multiple-of-128 divisor of hw that is <= cap; else the full extent."""
    best = None
    t = 128
    while t <= min(hw, cap):
        if hw % t == 0:
            best = t
        t += 128
    return best if best is not None else hw


def _patches_cfirst(x, kernel_size, stride, compute_dtype):
    """NCHW -> (N, K=Cin*k*k, Ho*Wo), feature order (Cin, kh, kw) matching weight.reshape.

    For k=1, stride=1 this is a zero-copy reshape (no HBM im2col materialization).
    """
    n, cin, h, w = x.shape
    k = kernel_size
    pad = k // 2
    ho = (h + 2 * pad - k) // stride + 1
    wo = (w + 2 * pad - k) // stride + 1
    x = x.astype(compute_dtype)
    if k == 1 and stride == 1:
        return x.reshape(n, cin, h * w), ho, wo
    # TODO(synk): for k>1 build patches inside the kernel from shifted/overlapping input
    # tiles instead of materializing the k^2-expanded im2col matrix in HBM.
    xp = jnp.pad(x, ((0, 0), (0, 0), (pad, pad), (pad, pad)))
    cols = []
    for kh in range(k):
        for kw in range(k):
            cols.append(xp[:, :, kh:kh + (ho - 1) * stride + 1:stride,
                              kw:kw + (wo - 1) * stride + 1:stride])
    patches = jnp.stack(cols, axis=2).reshape(n, cin * k * k, ho * wo)
    return patches, ho, wo


# ----------------------------------------------------------------------------- forward
def conv_block_forward(x, weight, gamma, beta, *, kernel_size=1, stride=1,
                       eps=1e-5, compute_dtype=jnp.bfloat16, hw_tile_cap=2048):
    """ConvBlock forward. x: (N, Cin, H, W) NCHW, weight: (Cout, Cin, k, k)."""
    n, cin, h, w = x.shape
    cout = weight.shape[0]
    k = kernel_size
    kdim = cin * k * k

    xr, ho, wo = _patches_cfirst(x, k, stride, compute_dtype)   # (N, K, Ho*Wo)
    hw = ho * wo
    tile = _pick_hw_tile(hw, hw_tile_cap)
    n_tiles = hw // tile
    m_total = n * hw

    w2d = weight.reshape(cout, kdim).astype(compute_dtype)       # (Cout, K)

    # ---- phase 1: per-channel batch statistics (sum, sum of squares) -----------------
    stats = pl.pallas_call(
        _stats_kernel,
        out_shape=jax.ShapeDtypeStruct((cout, 2), jnp.float32),
        grid=(n, n_tiles),
        in_specs=[
            pl.BlockSpec((1, kdim, tile), lambda b, t: (b, 0, t)),
            pl.BlockSpec((cout, kdim), lambda b, t: (0, 0)),
        ],
        out_specs=pl.BlockSpec((cout, 2), lambda b, t: (0, 0)),
        scratch_shapes=[pltpu.VMEM((cout, 1), jnp.float32),
                        pltpu.VMEM((cout, 1), jnp.float32)],
        compiler_params=pltpu.CompilerParams(
            dimension_semantics=("arbitrary", "arbitrary")),
    )(xr, w2d)

    # Tiny per-channel glue in f32 (done once, outside the tiled loops).
    mean = stats[:, 0] / m_total
    var = jnp.maximum(stats[:, 1] / m_total - mean * mean, 0.0)   # biased (train-mode) var
    inv_std = lax.rsqrt(var + eps)
    g = gamma.astype(jnp.float32)
    b_ = beta.astype(jnp.float32)
    scale = (g * inv_std).reshape(cout, 1)
    shift = (b_ - mean * g * inv_std).reshape(cout, 1)

    # ---- phase 2: recompute conv (cheap for k=1) + fused BN affine + ReLU -------------
    out = pl.pallas_call(
        _apply_kernel,
        out_shape=jax.ShapeDtypeStruct((n, cout, hw), jnp.float32),
        grid=(n, n_tiles),
        in_specs=[
            pl.BlockSpec((1, kdim, tile), lambda b, t: (b, 0, t)),
            pl.BlockSpec((cout, kdim), lambda b, t: (0, 0)),
            pl.BlockSpec((cout, 1), lambda b, t: (0, 0)),
            pl.BlockSpec((cout, 1), lambda b, t: (0, 0)),
        ],
        out_specs=pl.BlockSpec((1, cout, tile), lambda b, t: (b, 0, t)),
        compiler_params=pltpu.CompilerParams(
            dimension_semantics=("parallel", "parallel")),
    )(xr, w2d, scale, shift)

    return out.reshape(n, cout, ho, wo)   # already NCHW; pure reshape, no transpose


# ----------------------------------------------------------------------------- reference
def _reference(x, weight, gamma, beta, *, kernel_size=1, stride=1, eps=1e-5,
               conv_dtype=jnp.float32):
    pad = kernel_size // 2
    y = lax.conv_general_dilated(
        x.astype(conv_dtype).astype(jnp.float32),
        weight.astype(conv_dtype).astype(jnp.float32),
        window_strides=(stride, stride),
        padding=((pad, pad), (pad, pad)),
        dimension_numbers=("NCHW", "OIHW", "NCHW"))
    mu = jnp.mean(y, axis=(0, 2, 3), keepdims=True)
    var = jnp.mean((y - mu) ** 2, axis=(0, 2, 3), keepdims=True)
    y = gamma.reshape(1, -1, 1, 1) * (y - mu) / jnp.sqrt(var + eps) + beta.reshape(1, -1, 1, 1)
    return jnp.maximum(y, 0.0)


if __name__ == "__main__":
    key = jax.random.PRNGKey(0)
    kx, kw = jax.random.split(key)

    N, Cin, H, W = 2, 4, 16, 16
    Cout, K = 8, 1   # ConvBlock defaults: kernel_size=1, stride=1

    x = jax.random.normal(kx, (N, Cin, H, W), dtype=jnp.float32)
    # Conv weight: synthetic deterministic init (bias=False since normalizer is used).
    weight = jax.random.normal(kw, (Cout, Cin, K, K), dtype=jnp.float32) * 0.1
    # BatchNorm2d init: gamma=1, beta=0 (train mode -> batch statistics).
    gamma = jnp.ones((Cout,), dtype=jnp.float32)
    beta = jnp.zeros((Cout,), dtype=jnp.float32)

    out = conv_block_forward(x, weight, gamma, beta, kernel_size=K, stride=1)
    out = jax.block_until_ready(out)
    assert out.shape == (N, Cout, H, W)

    # Exact-semantics check against a reference that uses the same bf16-rounded MXU inputs.
    ref_bf16 = _reference(x, weight, gamma, beta, kernel_size=K, stride=1,
                          conv_dtype=jnp.bfloat16)
    err_bf16 = float(jnp.max(jnp.abs(out - ref_bf16)))
    assert jnp.allclose(out, ref_bf16, atol=1e-3, rtol=1e-3), err_bf16

    # Loose check against the pure-f32 reference (bf16 MXU inputs are an intentional
    # performance choice; BN output is O(1) so 5e-2 bounds the bf16 rounding effect).
    ref_f32 = _reference(x, weight, gamma, beta, kernel_size=K, stride=1,
                         conv_dtype=jnp.float32)
    err_f32 = float(jnp.max(jnp.abs(out - ref_f32)))
    assert jnp.allclose(out, ref_f32, atol=5e-2, rtol=5e-2), err_f32

    print("KERNEL_OK")
</pallas_src>

<mosaic_0001>
module attributes {stable_mosaic.version = 11 : i64} {
  func.func @_stats_kernel(%arg0: i32, %arg1: i32, %arg2: memref<1x4x256xbf16, #tpu.memory_space<vmem>>, %arg3: memref<8x4xbf16, #tpu.memory_space<vmem>>, %arg4: memref<8x2xf32, #tpu.memory_space<vmem>>, %arg5: memref<8x1xf32, #tpu.memory_space<vmem>>, %arg6: memref<8x1xf32, #tpu.memory_space<vmem>>) attributes {dimension_semantics = [#tpu.dimension_semantics<arbitrary>, #tpu.dimension_semantics<arbitrary>], iteration_bounds = array<i64: 2, 1>, scalar_prefetch = 0 : i64, scratch_operands = 2 : i64, tpu.core_type = #tpu.core_type<tc>, window_params = [{transform_indices = @transform_0, window_bounds = array<i64: 1, 4, 256>}, {pipeline_mode = #tpu.pipeline_mode<synchronous>, transform_indices = @transform_1, window_bounds = array<i64: 8, 4>}, {pipeline_mode = #tpu.pipeline_mode<synchronous>, transform_indices = @transform_2, window_bounds = array<i64: 8, 2>}]} {
    %c0_i32 = arith.constant 0 : i32
    %0 = arith.cmpi eq, %arg0, %c0_i32 : i32
    %c0_i32_0 = arith.constant 0 : i32
    %1 = arith.cmpi eq, %arg1, %c0_i32_0 : i32
    %2 = arith.andi %0, %1 : i1
    %c1_i32 = arith.constant 1 : i32
    %3 = arith.cmpi eq, %arg0, %c1_i32 : i32
    %c0_i32_1 = arith.constant 0 : i32
    %4 = arith.cmpi eq, %arg1, %c0_i32_1 : i32
    %5 = arith.andi %3, %4 : i1
    %6 = arith.extui %2 : i1 to i32
    %c0_i32_2 = arith.constant 0 : i32
    %7 = arith.cmpi ne, %6, %c0_i32_2 : i32
    scf.if %7 {
      %cst_18 = arith.constant 0.000000e+00 : f32
      %25 = vector.broadcast %cst_18 : f32 to vector<8x1xf32>
      %c0_19 = arith.constant 0 : index
      %c0_20 = arith.constant 0 : index
      %26 = vector.load %arg5[%c0_19, %c0_20] : memref<8x1xf32, #tpu.memory_space<vmem>>, vector<8x1xf32>
      tpu.vector_store %arg5[%c0_19, %c0_20], %25 {strides = array<i32>} : memref<8x1xf32, #tpu.memory_space<vmem>>, vector<8x1xf32>,
      %cst_21 = arith.constant 0.000000e+00 : f32
      %27 = vector.broadcast %cst_21 : f32 to vector<8x1xf32>
      %c0_22 = arith.constant 0 : index
      %c0_23 = arith.constant 0 : index
      %28 = vector.load %arg6[%c0_22, %c0_23] : memref<8x1xf32, #tpu.memory_space<vmem>>, vector<8x1xf32>
      tpu.vector_store %arg6[%c0_22, %c0_23], %27 {strides = array<i32>} : memref<8x1xf32, #tpu.memory_space<vmem>>, vector<8x1xf32>,
    } else {
    }
    %c0 = arith.constant 0 : index
    %c0_3 = arith.constant 0 : index
    %8 = vector.load %arg3[%c0, %c0_3] : memref<8x4xbf16, #tpu.memory_space<vmem>>, vector<8x4xbf16>
    %c0_4 = arith.constant 0 : index
    %c0_5 = arith.constant 0 : index
    %c0_6 = arith.constant 0 : index
    %9 = vector.load %arg2[%c0_4, %c0_5, %c0_6] : memref<1x4x256xbf16, #tpu.memory_space<vmem>>, vector<1x4x256xbf16>
    %10 = vector.shape_cast %9 : vector<1x4x256xbf16> to vector<4x256xbf16>
    %cst = arith.constant dense<0.000000e+00> : vector<8x256xf32>
    %11 = tpu.matmul %8, %10, %cst {dimension_numbers = #tpu.dot_dimension_numbers<[1], [0], [0], [1], [0, 0, 1, 1], [], []>} : vector<8x4xbf16>, vector<4x256xbf16>, vector<8x256xf32> -> vector<8x256xf32>
    %c0_7 = arith.constant 0 : index
    %c0_8 = arith.constant 0 : index
    %12 = vector.load %arg5[%c0_7, %c0_8] : memref<8x1xf32, #tpu.memory_space<vmem>>, vector<8x1xf32>
    %cst_9 = arith.constant dense<0.000000e+00> : vector<8xf32>
    %13 = vector.multi_reduction <add>, %11, %cst_9 [1] : vector<8x256xf32> to vector<8xf32>
    %14 = vector.shape_cast %13 : vector<8xf32> to vector<8x1xf32>
    %15 = arith.addf %12, %14 : vector<8x1xf32>
    %c0_10 = arith.constant 0 : index
    %c0_11 = arith.constant 0 : index
    %16 = vector.load %arg5[%c0_10, %c0_11] : memref<8x1xf32, #tpu.memory_space<vmem>>, vector<8x1xf32>
    tpu.vector_store %arg5[%c0_10, %c0_11], %15 {strides = array<i32>} : memref<8x1xf32, #tpu.memory_space<vmem>>, vector<8x1xf32>,
    %c0_12 = arith.constant 0 : index
    %c0_13 = arith.constant 0 : index
    %17 = vector.load %arg6[%c0_12, %c0_13] : memref<8x1xf32, #tpu.memory_space<vmem>>, vector<8x1xf32>
    %18 = arith.mulf %11, %11 : vector<8x256xf32>
    %cst_14 = arith.constant dense<0.000000e+00> : vector<8xf32>
    %19 = vector.multi_reduction <add>, %18, %cst_14 [1] : vector<8x256xf32> to vector<8xf32>
    %20 = vector.shape_cast %19 : vector<8xf32> to vector<8x1xf32>
    %21 = arith.addf %17, %20 : vector<8x1xf32>
    %c0_15 = arith.constant 0 : index
    %c0_16 = arith.constant 0 : index
    %22 = vector.load %arg6[%c0_15, %c0_16] : memref<8x1xf32, #tpu.memory_space<vmem>>, vector<8x1xf32>
    tpu.vector_store %arg6[%c0_15, %c0_16], %21 {strides = array<i32>} : memref<8x1xf32, #tpu.memory_space<vmem>>, vector<8x1xf32>,
    %23 = arith.extui %5 : i1 to i32
    %c0_i32_17 = arith.constant 0 : i32
    %24 = arith.cmpi ne, %23, %c0_i32_17 : i32
    scf.if %24 {
      %c0_18 = arith.constant 0 : index
      %c0_19 = arith.constant 0 : index
      %25 = vector.load %arg5[%c0_18, %c0_19] : memref<8x1xf32, #tpu.memory_space<vmem>>, vector<8x1xf32>
      %c0_20 = arith.constant 0 : index
      %c0_21 = arith.constant 0 : index
      %26 = vector.load %arg4[%c0_20, %c0_21] : memref<8x2xf32, #tpu.memory_space<vmem>>, vector<8x1xf32>
      tpu.vector_store %arg4[%c0_20, %c0_21], %25 {strides = array<i32>} : memref<8x2xf32, #tpu.memory_space<vmem>>, vector<8x1xf32>,
      %c0_22 = arith.constant 0 : index
      %c0_23 = arith.constant 0 : index
      %27 = vector.load %arg6[%c0_22, %c0_23] : memref<8x1xf32, #tpu.memory_space<vmem>>, vector<8x1xf32>
      %c0_24 = arith.constant 0 : index
      %c1 = arith.constant 1 : index
      %28 = vector.load %arg4[%c0_24, %c1] : memref<8x2xf32, #tpu.memory_space<vmem>>, vector<8x1xf32>
      tpu.vector_store %arg4[%c0_24, %c1], %27 {strides = array<i32>} : memref<8x2xf32, #tpu.memory_space<vmem>>, vector<8x1xf32>,
    } else {
    }
    return
  }
  func.func @transform_0(%arg0: i32, %arg1: i32) -> (i32, i32, i32) {
    %c0_i32 = arith.constant 0 : i32
    %c0_i32_0 = arith.constant 0 : i32
    return %arg0, %c0_i32, %arg1 : i32, i32, i32
  }
  func.func @transform_1(%arg0: i32, %arg1: i32) -> (i32, i32) {
    %c0_i32 = arith.constant 0 : i32
    %c0_i32_0 = arith.constant 0 : i32
    %c0_i32_1 = arith.constant 0 : i32
    return %c0_i32, %c0_i32_0 : i32, i32
  }
  func.func @transform_2(%arg0: i32, %arg1: i32) -> (i32, i32) {
    %c0_i32 = arith.constant 0 : i32
    %c0_i32_0 = arith.constant 0 : i32
    %c0_i32_1 = arith.constant 0 : i32
    return %c0_i32, %c0_i32_0 : i32, i32
  }
}

</mosaic_0001>

<llo_original>
// kernel: tpu_custom_call.1
$region0: #{tpu_custom_call.1}
  #allocation0 [shape = 'u32[]', space=smem, size = 0x4, offset = 0x4, fixed_abs, tag = 'smem constant byte address 0x4 - core index']
  #allocation1 [shape = 'u32[144,128]{1,0:T(1,128)}', space=vmem, size = 0x12000, scoped, tag = 'internal scratch']
  #allocation2 [shape = 'f32[8,1]{1,0:T(8,128)}', space=vmem, size = 0x1000, scoped, tag = 'scratch operand']
  #allocation3 [shape = 'f32[8,1]{1,0:T(8,128)}', space=vmem, size = 0x1000, scoped, tag = 'scratch operand']
  %s0 = inlined_call_operand.hbm [shape: bf16[2,4,256], index: 0, kind: input, shape index: {}]
  %s1 = inlined_call_operand.vmem [shape: bf16[8,4], index: 1, kind: input, shape index: {}]
  %s2 = inlined_call_operand.vmem [shape: f32[8,2], index: 2, kind: output, shape index: {}]
  %s3 = sld [smem:[#allocation0]]
  $region53: #{tpu_custom_call.1} parent=0
    _
  %s5 = ssub.s32 1, %s3
  %s6 = scalar_select 0, %s5, %s3
  $region1: #{tpu_custom_call.1} parent=0
    #allocation4 [shape = 'u8[4096]{0}', space=vmem, size = 0x1000, scoped, tag = 'input window, operand 0']
    #allocation5 [shape = 's32[2]{0}', space=sflag, size = 0x8, scoped, tag = 'scoped memory for tpu_custom_call.1']
    %7 = vsyncpa [#allocation5], 0
    %s8 = scalar_lea.sflag [#allocation5], 1
    %9 = vsyncpa %s8, 0
    loop: start=0, step=1, limit=4
    $region2: #{tpu_custom_call.1} parent=1 // loop_pre_header
      _
    $region3: #{tpu_custom_call.1} parent=1 // loop_header
      %s11 = sphi 0, %s15
      %p12 = scmp.ge.s32.totalorder %s11, 4
      %s18 = sphi 0, %s30
      %s19 = sphi 0, %s26
      %s20 = sphi 0, %s18
      %s21 = sphi 0, %s19
      %s22 = sphi 0, %s20
      %s23 = sphi 0, %s21
      %s35 = sphi 0, %s37
      %s38 = sphi 0, %s35
      %s39 = sphi 0, %s38
      %s55 = sphi 0, %s39
      %s59 = sphi 0, %s59
      %s61 = sphi 0, %s59
      %s62 = sphi 0, %s61
      %s76 = sphi 0, %s62
      %s80 = sphi 0, %s80
      %s82 = sphi 0, %s80
      %s83 = sphi 0, %s82
      %s97 = sphi 0, %s83
    $region4: #{tpu_custom_call.1} parent=1 // loop_header_branch
      %14 = sbr.rel (%p12) target = $region8
    $region5: #{tpu_custom_call.1} parent=1 // loop_body
      %s16 = ssub.s32 %s11, 1
      %s17 = ssub.s32 %s11, 2
      %s24 = sadd.s32 1, %s19
      %p25 = scmp.ge.s32.totalorder %s24, 1
      %s26 = scalar_select %p25, 0, %s24
      %s27 = sadd.s32 1, %s18
      %s28 = scalar_select %p25, %s27, %s18
      %p29 = scmp.ge.s32.totalorder %s28, 2
      %s30 = scalar_select %p29, 0, %s28
      %s31 = ssub.s32 %s18, %s30
      %s32 = ssub.s32 %s19, %s26
      %s33 = sor.u32 %s31, %s32
      %p34 = scmp.eq.s32.totalorder %s33, 0
      %s36 = sadd.s32 %s35, 1
      %s37 = scalar_select %p34, %s35, %s36
      %p40 = pneg %p34
      %p41 = scmp.eq.s32.totalorder %s11, 1
      %p42 = por %p40, %p41
      %p43 = scmp.ne.s32.totalorder %s35, %s38
      %p44 = scmp.eq.s32.totalorder %s11, 0
      %p45 = por %p43, %p44
      %p46 = scmp.ne.s32.totalorder %s35, %s38
      %p47 = scmp.eq.s32.totalorder %s16, 1
      %p48 = por %p46, %p47
      %p49 = scmp.ne.s32.totalorder %s38, %s39
      %p50 = scmp.eq.s32.totalorder %s16, 0
      %p51 = por %p49, %p50
      %p52 = scmp.ne.s32.totalorder %s38, %s39
      %p53 = scmp.eq.s32.totalorder %s17, 1
      %p54 = por %p52, %p53
      %p56 = scmp.ne.s32.totalorder %s39, %s55
      %p57 = scmp.eq.s32.totalorder %s17, 0
      %p58 = por %p56, %p57
      %s60 = sadd.s32 %s59, 1
      %p63 = scmp.eq.s32.totalorder %s11, 1
      %p64 = scmp.ne.s32.totalorder %s59, %s61
      %p65 = scmp.eq.s32.totalorder %s11, 0
      %p66 = por %p64, %p65
      %p67 = scmp.ne.s32.totalorder %s59, %s61
      %p68 = scmp.eq.s32.totalorder %s16, 1
      %p69 = por %p67, %p68
      %p70 = scmp.ne.s32.totalorder %s61, %s62
      %p71 = scmp.eq.s32.totalorder %s16, 0
      %p72 = por %p70, %p71
      %p73 = scmp.ne.s32.totalorder %s61, %s62
      %p74 = scmp.eq.s32.totalorder %s17, 1
      %p75 = por %p73, %p74
      %p77 = scmp.ne.s32.totalorder %s62, %s76
      %p78 = scmp.eq.s32.totalorder %s17, 0
      %p79 = por %p77, %p78
      %s81 = sadd.s32 %s80, 1
      %p84 = scmp.eq.s32.totalorder %s11, 1
      %p85 = scmp.ne.s32.totalorder %s80, %s82
      %p86 = scmp.eq.s32.totalorder %s11, 0
      %p87 = por %p85, %p86
      %p88 = scmp.ne.s32.totalorder %s80, %s82
      %p89 = scmp.eq.s32.totalorder %s16, 1
      %p90 = por %p88, %p89
      %p91 = scmp.ne.s32.totalorder %s82, %s83
      %p92 = scmp.eq.s32.totalorder %s16, 0
      %p93 = por %p91, %p92
      %p94 = scmp.ne.s32.totalorder %s82, %s83
      %p95 = scmp.eq.s32.totalorder %s17, 1
      %p96 = por %p94, %p95
      %p98 = scmp.ne.s32.totalorder %s83, %s97
      %p99 = scmp.eq.s32.totalorder %s17, 0
      %p100 = por %p98, %p99
      %p101 = scmp.le.s32.totalorder 1, %s11
      %p102 = scmp.lt.s32.totalorder %s11, 3
      %p103 = pnand %p101, %p102
      %p104 = pneg %p103
      // Predicated region
      $region9: #{tpu_custom_call.1} parent=5 // pred_check
        _
      $region10: #{tpu_custom_call.1} parent=5 // pred_check_branch
        %106 = sbr.rel (%p103) target = $region12
      $region11: #{tpu_custom_call.1} parent=5 // pred_region
        %s107 = ssub.s32 %s11, 1
        // Predicated region
        $region13: #{tpu_custom_call.1} parent=11 // pred_check
          %p108 = pneg %p72
        $region14: #{tpu_custom_call.1} parent=11 // pred_check_branch
          %110 = sbr.rel (%p108) target = $region16
        $region15: #{tpu_custom_call.1} parent=11 // pred_region
          _
        $region16: #{tpu_custom_call.1} parent=11 // pred_fallthru
          _
      $region12: #{tpu_custom_call.1} parent=5 // pred_fallthru
        _
      %p111 = scmp.lt.s32.totalorder %s11, 2
      // Predicated region
      $region17: #{tpu_custom_call.1} parent=5 // pred_check
        %p112 = pneg %p111
      $region18: #{tpu_custom_call.1} parent=5 // pred_check_branch
        %114 = sbr.rel (%p112) target = $region20
      $region19: #{tpu_custom_call.1} parent=5 // pred_region
        // Predicated region
        $region21: #{tpu_custom_call.1} parent=19 // pred_check
          %p115 = pneg %p45
        $region22: #{tpu_custom_call.1} parent=19 // pred_check_branch
          %117 = sbr.rel (%p115) target = $region24
        $region23: #{tpu_custom_call.1} parent=19 // pred_region
          %s118 = sand.u32 %s35, 1
          %s119 = scalar_lea.sflag [#allocation5], %s118
          %s120 = sand.u32 %s35, 1
          %s121 = smul.addr %s120, 4
          %s122 = scalar_lea.vmem [#allocation4], %s121
          %s123 = smul.u32 2, %s19
          %s125 = ssub.s32 64, 64
          %126 = vsyncadd %s119, %s125
          %s127 = smul.addr %s18, 2
          %s128 = sadd.s32 %s123, %s127
          %s129 = smul.addr %s128, 32
          %s130 = scalar_lea.hbm %s0, %s129
          %s132 = sshll.u32 %s122, 4
          %s133 = int_to_ptr.vmem [resolvable:$true] %s132
          %135 = dma.hbm_to_vmem [thread:$0]  %s130, 64, %s133, %s119
        $region24: #{tpu_custom_call.1} parent=19 // pred_fallthru
          _
      $region20: #{tpu_custom_call.1} parent=5 // pred_fallthru
        _
      %p136 = scmp.le.s32.totalorder 1, %s11
      %p137 = scmp.lt.s32.totalorder %s11, 3
      %p138 = pnand %p136, %p137
      %p139 = pneg %p138
      // Predicated region
      $region25: #{tpu_custom_call.1} parent=5 // pred_check
        _
      $region26: #{tpu_custom_call.1} parent=5 // pred_check_branch
        %141 = sbr.rel (%p138) target = $region28
      $region27: #{tpu_custom_call.1} parent=5 // pred_region
        %s142 = ssub.s32 %s11, 1
        %s143 = sand.u32 %s38, 1
        %s144 = scalar_lea.sflag [#allocation5], %s143
        %s145 = sand.u32 %s38, 1
        %s146 = smul.addr %s145, 4
        %s147 = scalar_lea.vmem [#allocation4], %s146
        // Predicated region
        $region29: #{tpu_custom_call.1} parent=27 // pred_check
          %p148 = pneg %p51
        $region30: #{tpu_custom_call.1} parent=27 // pred_check_branch
          %150 = sbr.rel (%p148) target = $region32
        $region31: #{tpu_custom_call.1} parent=27 // pred_region
          %151 = dma.done %s144, 64
        $region32: #{tpu_custom_call.1} parent=27 // pred_fallthru
          _
        %s152 = sand.u32 %s38, 1
        %s153 = scalar_lea.sflag [#allocation5], %s152
        %s154 = sand.u32 %s38, 1
        %s155 = smul.addr %s154, 4
        %s156 = scalar_lea.vmem [#allocation4], %s155
        %p157 = pneg %p51
        %p158 = pneg %p48
        %p159 = pneg %p72
        %p160 = pneg %p69
        %p161 = pneg %p93
        %p162 = pneg %p90
        %s163 = smul.u32 2, %s21
        %p165 = scmp.eq.s32.totalorder %s20, 0
        %p166 = scmp.eq.s32.totalorder %s21, 0
        %p167 = pnand %p165, %p166
        %p168 = pneg %p167
        %p169 = scmp.eq.s32.totalorder %s20, 1
        %p170 = pnand %p169, %p166
        %p171 = pneg %p170
        // Predicated region
        $region33: #{tpu_custom_call.1} parent=27 // pred_check
          _
        $region34: #{tpu_custom_call.1} parent=27 // pred_check_branch
          %173 = sbr.rel (%p167) target = $region36
        $region35: #{tpu_custom_call.1} parent=27 // pred_region
          %vm174 = vcmask 7168
          %175 = vst.msk [vmem:[#allocation2] sm:$0xff] %vm174, 0.0
          %176 = vst.msk [vmem:[#allocation3] sm:$0xff] %vm174, 0.0
        $region36: #{tpu_custom_call.1} parent=27 // pred_fallthru
          _
        %v177 = vld [vmem:[%s1] sm:$0xf]
        %v178 = vld [vmem:[%s147] sm:$0xf]
        %v181 = vunpack.c.l.s4 1983009808
        %v182 = vunpack.c.0.s8 %v181
        %v183 = vlaneseq
        %v184 = vshrl.u32 %v183, 7
        %v185 = vsub.s32 %v182, %v184
        %v186 = vrot.slane %v178, %v185
        %v187 = vcombine.high %v186, %v186
        %vm188 = vcmask 31744
        %v190 = vsel %vm188, %v177, 0
        %vm192 = vcmask 1041408
        %v194 = vsel %vm192, %v186, 0
        %v197 = vsel %vm192, %v187, 0
        %199 = vmatprep.subr.bf16.mxu0 %v197
        %200 = vmatpush1.bf16.msra.mxu0 %v194
        %201 = vmatprep.subr.bf16.mxu0 0
        %202 = vmatpush1.bf16.msra.mxu0 0
        %203 = vmatprep.subr.bf16.mxu0 0
        %204 = vmatpush1.bf16.msra.mxu0 0
        %205 = vmatprep.subr.bf16.mxu0 0
        %206 = vmatpush1.bf16.msra.mxu0 0
        %207 = vmatprep.subr.bf16.mxu0 0
        %208 = vmatpush1.bf16.msra.mxu0 0
        %209 = vmatprep.subr.bf16.mxu0 0
        %210 = vmatpush1.bf16.msra.mxu0 0
        %211 = vmatprep.subr.bf16.mxu0 0
        %212 = vmatpush1.bf16.msra.mxu0 0
        %213 = vmatprep.subr.bf16.mxu0 0
        %214 = vmatpush1.bf16.msra.mxu0 0
        %215 = vmatprep.subr.bf16.mxu0 0
        %216 = vmatpush1.bf16.msra.mxu0 0
        %217 = vmatprep.subr.bf16.mxu0 0
        %218 = vmatpush1.bf16.msra.mxu0 0
        %219 = vmatprep.subr.bf16.mxu0 0
        %220 = vmatpush1.bf16.msra.mxu0 0
        %221 = vmatprep.subr.bf16.mxu0 0
        %222 = vmatpush1.bf16.msra.mxu0 0
        %223 = vmatprep.subr.bf16.mxu0 0
        %224 = vmatpush1.bf16.msra.mxu0 0
        %225 = vmatprep.subr.bf16.mxu0 0
        %226 = vmatpush1.bf16.msra.mxu0 0
        %227 = vmatprep.subr.bf16.mxu0 0
        %228 = vmatpush1.bf16.msra.mxu0 0
        %229 = vmatprep.subr.bf16.mxu0 0
        %230 = vmatpush1.bf16.msra.mxu0 0
        %231 = vmatprep.mubr.bf16.mxu0 0
        %232 = vmatmul.mubr.bf16.gmra.mrb[0].mxu0 %v190
        %v233 = vpop.f32.mrb[0].mxu0
        %v234 = vadd.f32 0.0, %v233
        %v235 = vpop.f32.mrb[0].mxu0
        %v236 = vadd.f32 0.0, %v235
        %v237 = vpop.f32.mrb[0].mxu0
        %v238 = vpop.f32.mrb[0].mxu0
        %239 = vdwg.mxu0
        %v240 = vld [vmem:[#allocation2] sm:$0xff]
        %v241 = vadd.f32 %v234, %v236
        %242 = vadd.xlane.f32.xlu0 %v241
        %v243 = vpop.xlane.xlu0 %242
        %v244 = vadd.f32 %v240, %v243
        %vm245 = vcmask 7168
        %246 = vst.msk [vmem:[#allocation2] sm:$0xff] %vm245, %v244
        %v247 = vld [vmem:[#allocation3] sm:$0xff]
        %v248 = vmul.f32 %v234, %v234
        %v249 = vmul.f32 %v236, %v236
        %v250 = vadd.f32 %v248, %v249
        %251 = vadd.xlane.f32.xlu0 %v250
        %v252 = vpop.xlane.xlu0 %251
        %v253 = vadd.f32 %v247, %v252
        %254 = vst.msk [vmem:[#allocation3] sm:$0xff] %vm245, %v253
        // Predicated region
        $region37: #{tpu_custom_call.1} parent=27 // pred_check
          _
        $region38: #{tpu_custom_call.1} parent=27 // pred_check_branch
          %256 = sbr.rel (%p170) target = $region40
        $region39: #{tpu_custom_call.1} parent=27 // pred_region
          %v257 = vld [vmem:[#allocation2] sm:$0xff]
          %258 = vst.msk [vmem:[%s2] sm:$0xff] %vm245, %v257
          %v259 = vld [vmem:[#allocation3] sm:$0xff]
          %261 = vrot.lane.b32.xlu0 %v259, 1
          %v262 = vpop.permute.xlu0 %261
          %vm264 = vcmask 15368
          %265 = vst.msk [vmem:[%s2] sm:$0xff] %vm264, %v262
        $region40: #{tpu_custom_call.1} parent=27 // pred_fallthru
          _
        // Predicated region
        $region41: #{tpu_custom_call.1} parent=27 // pred_check
          %p266 = pneg %p90
        $region42: #{tpu_custom_call.1} parent=27 // pred_check_branch
          %268 = sbr.rel (%p266) target = $region44
        $region43: #{tpu_custom_call.1} parent=27 // pred_region
          _
        $region44: #{tpu_custom_call.1} parent=27 // pred_fallthru
          _
        // Predicated region
        $region45: #{tpu_custom_call.1} parent=27 // pred_check
          %p269 = pneg %p90
        $region46: #{tpu_custom_call.1} parent=27 // pred_check_branch
          %271 = sbr.rel (%p269) target = $region48
        $region47: #{tpu_custom_call.1} parent=27 // pred_region
          _
        $region48: #{tpu_custom_call.1} parent=27 // pred_fallthru
          _
      $region28: #{tpu_custom_call.1} parent=5 // pred_fallthru
        _
      %p272 = scmp.le.s32.totalorder 2, %s11
      // Predicated region
      $region49: #{tpu_custom_call.1} parent=5 // pred_check
        %p273 = pneg %p272
      $region50: #{tpu_custom_call.1} parent=5 // pred_check_branch
        %275 = sbr.rel (%p273) target = $region52
      $region51: #{tpu_custom_call.1} parent=5 // pred_region
        %s276 = ssub.s32 %s11, 2
      $region52: #{tpu_custom_call.1} parent=5 // pred_fallthru
        _
    $region6: #{tpu_custom_call.1} parent=1 // loop_footer
      %s15 = sadd.s32 1, %s11
    $region7: #{tpu_custom_call.1} parent=1 // loop_footer_branch
      %10 = sbr.rel target = $region3
    $region8: #{tpu_custom_call.1} parent=1 // loop_exit
      _
    %277 = vsyncpa [#allocation5], 1
    %s278 = scalar_lea.sflag [#allocation5], 1
    %279 = vsyncpa %s278, 1

</llo_original>
